<compile_context>
chip_gen: v7x
topology: tpu7x:2x2x1
jax: 0.10.0
libtpu: 0.0.40
codegen_flags: <defaults>
</compile_context>

<pallas_src>
import jax
import jax.numpy as jnp
from jax.experimental import pallas as pl
from jax.experimental.pallas import tpu as pltpu


def _round_up(n, m):
    return (n + m - 1) // m * m


def _fc_kernel(x_ref, w1_ref, b1_ref, w2_ref, b2_ref, o_ref):
    # fc1 + ReLU (MXU matmul, f32 accumulation).
    h = jnp.dot(x_ref[...], w1_ref[...], preferred_element_type=jnp.float32)
    h = jnp.maximum(h + b1_ref[...], 0.0)          # b1 is (1, H_pad), broadcasts
    # fc2 + ReLU.
    y = jnp.dot(h.astype(w2_ref.dtype), w2_ref[...],
                preferred_element_type=jnp.float32)
    y = jnp.maximum(y + b2_ref[...], 0.0)          # b2 is (1, O_pad)
    o_ref[...] = y.astype(o_ref.dtype)


def fc_layers(x, w1, b1, w2, b2, *, tile_m=1024, use_bf16=False):
    """x: [B, 256] f32; w1: [256, H]; b1: [H]; w2: [H, O]; b2: [O] -> [B, O]."""
    B, F_in = x.shape
    F_w, H = w1.shape
    H2, O = w2.shape
    assert F_in == F_w and H == H2 and b1.shape == (H,) and b2.shape == (O,)

    # ---- lane padding (numerically exact: zero weight cols/rows + zero bias
    # contribute ReLU(0)=0 and are sliced off afterwards) ----
    H_pad = _round_up(H, 128)
    O_pad = _round_up(O, 128)

    w1_p = jnp.zeros((F_in, H_pad), w1.dtype).at[:, :H].set(w1)
    b1_p = jnp.zeros((1, H_pad), jnp.float32).at[:, :H].set(b1.astype(jnp.float32))
    w2_p = jnp.zeros((H_pad, O_pad), w2.dtype).at[:H, :O].set(w2)
    b2_p = jnp.zeros((1, O_pad), jnp.float32).at[:, :O].set(b2.astype(jnp.float32))

    # ---- adaptive batch tiling: big tiles for the HBM roofline, but sized to
    # ~ceil(B / n_tiles) (rounded to the 8-sublane granule) so padded rows are
    # minimal. Batch padded to a multiple of tile_m; pad rows sliced off. ----
    tile_m = max(8, min(tile_m, _round_up(B, 8)))
    n_tiles = pl.cdiv(B, tile_m)
    tile_m = _round_up(pl.cdiv(B, n_tiles), 8)
    B_pad = n_tiles * tile_m
    x_p = x if B_pad == B else jnp.zeros((B_pad, F_in), x.dtype).at[:B, :].set(x)

    if use_bf16:
        x_p = x_p.astype(jnp.bfloat16)
        w1_p = w1_p.astype(jnp.bfloat16)
        w2_p = w2_p.astype(jnp.bfloat16)

    grid = (n_tiles,)

    x_item = jnp.dtype(x_p.dtype).itemsize
    w_item = jnp.dtype(w1_p.dtype).itemsize
    vmem_bytes = (
        2 * tile_m * F_in * x_item              # double-buffered streamed x tile
        + 2 * tile_m * O_pad * 4                # double-buffered output tile (f32)
        + tile_m * H_pad * 4                    # intermediate h
        + F_in * H_pad * w_item + H_pad * 4     # resident w1 + b1
        + H_pad * O_pad * w_item + O_pad * 4    # resident w2 + b2
        + (4 << 20)                             # headroom
    )
    vmem_bytes = int(min(vmem_bytes, 48 << 20))  # stays under v7x's 64 MiB

    out_padded = pl.pallas_call(
        _fc_kernel,
        out_shape=jax.ShapeDtypeStruct((B_pad, O_pad), jnp.float32),
        grid_spec=pltpu.PrefetchScalarGridSpec(
            num_scalar_prefetch=0,
            grid=grid,
            in_specs=[
                pl.BlockSpec((tile_m, F_in), lambda i: (i, 0)),   # streamed x tile
                pl.BlockSpec((F_in, H_pad), lambda i: (0, 0)),    # w1 (resident)
                pl.BlockSpec((1, H_pad), lambda i: (0, 0)),       # b1 (resident)
                pl.BlockSpec((H_pad, O_pad), lambda i: (0, 0)),   # w2 (resident)
                pl.BlockSpec((1, O_pad), lambda i: (0, 0)),       # b2 (resident)
            ],
            out_specs=pl.BlockSpec((tile_m, O_pad), lambda i: (i, 0)),
        ),
        compiler_params=pltpu.CompilerParams(
            dimension_semantics=("parallel",),
            vmem_limit_bytes=vmem_bytes,
        ),
    )(x_p, w1_p, b1_p, w2_p, b2_p)

    return out_padded[:B, :O].astype(x.dtype)


def _init_params(key, out_features):
    # Deterministic synthetic init mimicking nn.Linear's uniform(-1/sqrt(fan_in), ...).
    k1, k2, k3, k4 = jax.random.split(key, 4)
    bound1 = 1.0 / jnp.sqrt(256.0)
    bound2 = 1.0 / jnp.sqrt(100.0)
    w1 = jax.random.uniform(k1, (256, 100), jnp.float32, -bound1, bound1)
    b1 = jax.random.uniform(k2, (100,), jnp.float32, -bound1, bound1)
    w2 = jax.random.uniform(k3, (100, out_features), jnp.float32, -bound2, bound2)
    b2 = jax.random.uniform(k4, (out_features,), jnp.float32, -bound2, bound2)
    return w1, b1, w2, b2


if __name__ == "__main__":
    key = jax.random.PRNGKey(0)
    k_in, k_p, k_in2 = jax.random.split(key, 3)

    out_features = 10
    w1, b1, w2, b2 = _init_params(k_p, out_features)

    def ref(x):
        return jnp.maximum(jnp.maximum(x @ w1 + b1, 0.0) @ w2 + b2, 0.0)

    # Small-shape correctness check (matches the PyTorch forward semantics).
    x_small = jax.random.normal(k_in, (8, 256), jnp.float32)
    y_small = jax.block_until_ready(fc_layers(x_small, w1, b1, w2, b2))
    assert y_small.shape == (8, out_features)
    assert jnp.allclose(y_small, ref(x_small), atol=1e-5, rtol=1e-5)

    # Larger, non-multiple-of-tile batch: exercises the adaptive-tile + batch/
    # lane padding path (grid length > 1 so both v7x TensorCores get work).
    x_big = jax.random.normal(k_in2, (2050, 256), jnp.float32)
    y_big = jax.block_until_ready(fc_layers(x_big, w1, b1, w2, b2, tile_m=1024))
    assert y_big.shape == (2050, out_features)
    assert jnp.allclose(y_big, ref(x_big), atol=1e-4, rtol=1e-4)

    print("KERNEL_OK")
</pallas_src>

<mosaic_0001>
module attributes {stable_mosaic.version = 11 : i64} {
  func.func @_fc_kernel(%arg0: i32, %arg1: memref<8x256xf32, #tpu.memory_space<vmem>>, %arg2: memref<256x128xf32, #tpu.memory_space<vmem>>, %arg3: memref<1x128xf32, #tpu.memory_space<vmem>>, %arg4: memref<128x128xf32, #tpu.memory_space<vmem>>, %arg5: memref<1x128xf32, #tpu.memory_space<vmem>>, %arg6: memref<8x128xf32, #tpu.memory_space<vmem>>) attributes {dimension_semantics = [#tpu.dimension_semantics<parallel>], iteration_bounds = array<i64: 1>, scalar_prefetch = 0 : i64, scratch_operands = 0 : i64, tpu.core_type = #tpu.core_type<tc>, window_params = [{transform_indices = @transform_0, window_bounds = array<i64: 8, 256>}, {pipeline_mode = #tpu.pipeline_mode<synchronous>, transform_indices = @transform_1, window_bounds = array<i64: 256, 128>}, {pipeline_mode = #tpu.pipeline_mode<synchronous>, transform_indices = @transform_2, window_bounds = array<i64: 1, 128>}, {pipeline_mode = #tpu.pipeline_mode<synchronous>, transform_indices = @transform_3, window_bounds = array<i64: 128, 128>}, {pipeline_mode = #tpu.pipeline_mode<synchronous>, transform_indices = @transform_4, window_bounds = array<i64: 1, 128>}, {transform_indices = @transform_5, window_bounds = array<i64: 8, 128>}]} {
    %c0 = arith.constant 0 : index
    %c0_0 = arith.constant 0 : index
    %0 = vector.load %arg1[%c0, %c0_0] : memref<8x256xf32, #tpu.memory_space<vmem>>, vector<8x256xf32>
    %c0_1 = arith.constant 0 : index
    %c0_2 = arith.constant 0 : index
    %1 = vector.load %arg2[%c0_1, %c0_2] : memref<256x128xf32, #tpu.memory_space<vmem>>, vector<256x128xf32>
    %cst = arith.constant dense<0.000000e+00> : vector<8x128xf32>
    %2 = tpu.matmul %0, %1, %cst {dimension_numbers = #tpu.dot_dimension_numbers<[1], [0], [0], [1], [0, 0, 1, 1], [], []>} : vector<8x256xf32>, vector<256x128xf32>, vector<8x128xf32> -> vector<8x128xf32>
    %c0_3 = arith.constant 0 : index
    %c0_4 = arith.constant 0 : index
    %3 = vector.load %arg3[%c0_3, %c0_4] : memref<1x128xf32, #tpu.memory_space<vmem>>, vector<1x128xf32>
    %4 = vector.broadcast %3 : vector<1x128xf32> to vector<8x128xf32>
    %5 = arith.addf %2, %4 : vector<8x128xf32>
    %cst_5 = arith.constant 0.000000e+00 : f32
    %6 = vector.broadcast %cst_5 : f32 to vector<8x128xf32>
    %7 = arith.maximumf %5, %6 : vector<8x128xf32>
    %c0_6 = arith.constant 0 : index
    %c0_7 = arith.constant 0 : index
    %8 = vector.load %arg4[%c0_6, %c0_7] : memref<128x128xf32, #tpu.memory_space<vmem>>, vector<128x128xf32>
    %cst_8 = arith.constant dense<0.000000e+00> : vector<8x128xf32>
    %9 = tpu.matmul %7, %8, %cst_8 {dimension_numbers = #tpu.dot_dimension_numbers<[1], [0], [0], [1], [0, 0, 1, 1], [], []>} : vector<8x128xf32>, vector<128x128xf32>, vector<8x128xf32> -> vector<8x128xf32>
    %c0_9 = arith.constant 0 : index
    %c0_10 = arith.constant 0 : index
    %10 = vector.load %arg5[%c0_9, %c0_10] : memref<1x128xf32, #tpu.memory_space<vmem>>, vector<1x128xf32>
    %11 = vector.broadcast %10 : vector<1x128xf32> to vector<8x128xf32>
    %12 = arith.addf %9, %11 : vector<8x128xf32>
    %cst_11 = arith.constant 0.000000e+00 : f32
    %13 = vector.broadcast %cst_11 : f32 to vector<8x128xf32>
    %14 = arith.maximumf %12, %13 : vector<8x128xf32>
    %c0_12 = arith.constant 0 : index
    %c0_13 = arith.constant 0 : index
    %15 = vector.load %arg6[%c0_12, %c0_13] : memref<8x128xf32, #tpu.memory_space<vmem>>, vector<8x128xf32>
    tpu.vector_store %arg6[%c0_12, %c0_13], %14 {strides = array<i32>} : memref<8x128xf32, #tpu.memory_space<vmem>>, vector<8x128xf32>,
    return
  }
  func.func @transform_0(%arg0: i32) -> (i32, i32) {
    %c0_i32 = arith.constant 0 : i32
    %c0_i32_0 = arith.constant 0 : i32
    return %arg0, %c0_i32 : i32, i32
  }
  func.func @transform_1(%arg0: i32) -> (i32, i32) {
    %c0_i32 = arith.constant 0 : i32
    %c0_i32_0 = arith.constant 0 : i32
    %c0_i32_1 = arith.constant 0 : i32
    return %c0_i32, %c0_i32_0 : i32, i32
  }
  func.func @transform_2(%arg0: i32) -> (i32, i32) {
    %c0_i32 = arith.constant 0 : i32
    %c0_i32_0 = arith.constant 0 : i32
    %c0_i32_1 = arith.constant 0 : i32
    return %c0_i32, %c0_i32_0 : i32, i32
  }
  func.func @transform_3(%arg0: i32) -> (i32, i32) {
    %c0_i32 = arith.constant 0 : i32
    %c0_i32_0 = arith.constant 0 : i32
    %c0_i32_1 = arith.constant 0 : i32
    return %c0_i32, %c0_i32_0 : i32, i32
  }
  func.func @transform_4(%arg0: i32) -> (i32, i32) {
    %c0_i32 = arith.constant 0 : i32
    %c0_i32_0 = arith.constant 0 : i32
    %c0_i32_1 = arith.constant 0 : i32
    return %c0_i32, %c0_i32_0 : i32, i32
  }
  func.func @transform_5(%arg0: i32) -> (i32, i32) {
    %c0_i32 = arith.constant 0 : i32
    %c0_i32_0 = arith.constant 0 : i32
    return %arg0, %c0_i32 : i32, i32
  }
}

</mosaic_0001>

<llo_original>
// kernel: tpu_custom_call.1
$region0: #{tpu_custom_call.1}
  #allocation0 [shape = 'u32[]', space=smem, size = 0x4, offset = 0x4, fixed_abs, tag = 'smem constant byte address 0x4 - core index']
  #allocation1 [shape = 'u32[144,128]{1,0:T(1,128)}', space=vmem, size = 0x12000, scoped, tag = 'internal scratch']
  %s0 = inlined_call_operand.hbm [shape: f32[8,256], index: 0, kind: input, shape index: {}]
  %s1 = inlined_call_operand.hbm [shape: f32[256,128], index: 1, kind: input, shape index: {}]
  %s2 = inlined_call_operand.vmem [shape: f32[1,128], index: 2, kind: input, shape index: {}]
  %s3 = inlined_call_operand.hbm [shape: f32[128,128], index: 3, kind: input, shape index: {}]
  %s4 = inlined_call_operand.vmem [shape: f32[1,128], index: 4, kind: input, shape index: {}]
  %s5 = inlined_call_operand.hbm [shape: f32[8,128], index: 5, kind: output, shape index: {}]
  %s6 = sld [smem:[#allocation0]]
  $region42: #{tpu_custom_call.1} parent=0
    _
  %s8 = ssub.s32 1, %s6
  %s9 = scalar_select 0, %s8, %s6
  $region1: #{tpu_custom_call.1} parent=0
    #allocation2 [shape = 'u8[8192]{0}', space=vmem, size = 0x2000, scoped, tag = 'input window, operand 0, single buffered']
    #allocation3 [shape = 's32[1]{0}', space=sflag, size = 0x4, scoped, tag = 'scoped memory for tpu_custom_call.1']
    #allocation4 [shape = 's32[1]{0}', space=sflag, size = 0x4, scoped, tag = 'scoped memory for tpu_custom_call.1']
    #allocation5 [shape = 'u8[131072]{0}', space=vmem, size = 0x20000, scoped, tag = 'input window, operand 1, single buffered']
    #allocation6 [shape = 's32[1]{0}', space=sflag, size = 0x4, scoped, tag = 'scoped memory for tpu_custom_call.1']
    #allocation7 [shape = 'u8[65536]{0}', space=vmem, size = 0x10000, scoped, tag = 'input window, operand 3, single buffered']
    #allocation8 [shape = 'u8[4096]{0}', space=vmem, size = 0x1000, scoped, tag = 'output window, operand 0, single buffered']
    %10 = vsyncpa [#allocation3], 0
    %11 = vsyncpa [#allocation6], 0
    %12 = vsyncpa [#allocation4], 0
    // Predicated region
    $region2: #{tpu_custom_call.1} parent=1 // pred_check
      _
    $region3: #{tpu_custom_call.1} parent=1 // pred_check_branch
      %14 = sbr.rel (0) target = $region5
    $region4: #{tpu_custom_call.1} parent=1 // pred_region
      %s16 = ssub.s32 256, 256
      %17 = vsyncadd [#allocation3], %s16
      %s19 = sshll.u32 [#allocation2], 4
      %s20 = int_to_ptr.vmem [resolvable:$true] %s19
      %22 = dma.hbm_to_vmem [thread:$0]  %s0, 256, %s20, [#allocation3]
    $region5: #{tpu_custom_call.1} parent=1 // pred_fallthru
      _
    // Predicated region
    $region6: #{tpu_custom_call.1} parent=1 // pred_check
      _
    $region7: #{tpu_custom_call.1} parent=1 // pred_check_branch
      %24 = sbr.rel (0) target = $region9
    $region8: #{tpu_custom_call.1} parent=1 // pred_region
      %s26 = ssub.s32 4096, 4096
      %27 = vsyncadd [#allocation6], %s26
      %s28 = sshll.u32 [#allocation5], 4
      %s29 = int_to_ptr.vmem [resolvable:$true] %s28
      %34 = dma.hbm_to_vmem [thread:$0]  %s1, 4096, %s29, [#allocation6], 128, 128, 8
    $region9: #{tpu_custom_call.1} parent=1 // pred_fallthru
      _
    // Predicated region
    $region10: #{tpu_custom_call.1} parent=1 // pred_check
      _
    $region11: #{tpu_custom_call.1} parent=1 // pred_check_branch
      %36 = sbr.rel (0) target = $region13
    $region12: #{tpu_custom_call.1} parent=1 // pred_region
      _
    $region13: #{tpu_custom_call.1} parent=1 // pred_fallthru
      _
    // Predicated region
    $region14: #{tpu_custom_call.1} parent=1 // pred_check
      _
    $region15: #{tpu_custom_call.1} parent=1 // pred_check_branch
      %38 = sbr.rel (0) target = $region17
    $region16: #{tpu_custom_call.1} parent=1 // pred_region
      %s40 = ssub.s32 2048, 2048
      %41 = vsyncadd [#allocation6], %s40
      %s42 = sshll.u32 [#allocation7], 4
      %s43 = int_to_ptr.vmem [resolvable:$true] %s42
      %48 = dma.hbm_to_vmem [thread:$0]  %s3, 2048, %s43, [#allocation6], 128, 128, 8
    $region17: #{tpu_custom_call.1} parent=1 // pred_fallthru
      _
    // Predicated region
    $region18: #{tpu_custom_call.1} parent=1 // pred_check
      _
    $region19: #{tpu_custom_call.1} parent=1 // pred_check_branch
      %50 = sbr.rel (0) target = $region21
    $region20: #{tpu_custom_call.1} parent=1 // pred_region
      _
    $region21: #{tpu_custom_call.1} parent=1 // pred_fallthru
      _
    // Predicated region
    $region22: #{tpu_custom_call.1} parent=1 // pred_check
      _
    $region23: #{tpu_custom_call.1} parent=1 // pred_check_branch
      %52 = sbr.rel (0) target = $region25
    $region24: #{tpu_custom_call.1} parent=1 // pred_region
      %53 = dma.done [#allocation3], 256
    $region25: #{tpu_custom_call.1} parent=1 // pred_fallthru
      _
    // Predicated region
    $region26: #{tpu_custom_call.1} parent=1 // pred_check
      _
    $region27: #{tpu_custom_call.1} parent=1 // pred_check_branch
      %55 = sbr.rel (0) target = $region29
    $region28: #{tpu_custom_call.1} parent=1 // pred_region
      %56 = dma.done [#allocation6], 4096
    $region29: #{tpu_custom_call.1} parent=1 // pred_fallthru
      _
    // Predicated region
    $region30: #{tpu_custom_call.1} parent=1 // pred_check
      _
    $region31: #{tpu_custom_call.1} parent=1 // pred_check_branch
      %58 = sbr.rel (0) target = $region33
    $region32: #{tpu_custom_call.1} parent=1 // pred_region
      %59 = dma.done [#allocation6], 2048
    $region33: #{tpu_custom_call.1} parent=1 // pred_fallthru
      _
    %v60 = vld [vmem:[#allocation2] sm:$0xff]
    %v61 = vld [vmem:[#allocation2 + $0x8] sm:$0xff]
    %v62 = vld [vmem:[#allocation5] sm:$0xff]
    %v63 = vld [vmem:[#allocation5 + $0x8] sm:$0xff]
    %v64 = vld [vmem:[#allocation5 + $0x10] sm:$0xff]
    %v65 = vld [vmem:[#allocation5 + $0x18] sm:$0xff]
    %v66 = vld [vmem:[#allocation5 + $0x20] sm:$0xff]
    %v67 = vld [vmem:[#allocation5 + $0x28] sm:$0xff]
    %v68 = vld [vmem:[#allocation5 + $0x30] sm:$0xff]
    %v69 = vld [vmem:[#allocation5 + $0x38] sm:$0xff]
    %v70 = vld [vmem:[#allocation5 + $0x40] sm:$0xff]
    %v71 = vld [vmem:[#allocation5 + $0x48] sm:$0xff]
    %v72 = vld [vmem:[#allocation5 + $0x50] sm:$0xff]
    %v73 = vld [vmem:[#allocation5 + $0x58] sm:$0xff]
    %v74 = vld [vmem:[#allocation5 + $0x60] sm:$0xff]
    %v75 = vld [vmem:[#allocation5 + $0x68] sm:$0xff]
    %v76 = vld [vmem:[#allocation5 + $0x70] sm:$0xff]
    %v77 = vld [vmem:[#allocation5 + $0x78] sm:$0xff]
    %v78 = vld [vmem:[#allocation5 + $0x80] sm:$0xff]
    %v79 = vld [vmem:[#allocation5 + $0x88] sm:$0xff]
    %v80 = vld [vmem:[#allocation5 + $0x90] sm:$0xff]
    %v81 = vld [vmem:[#allocation5 + $0x98] sm:$0xff]
    %v82 = vld [vmem:[#allocation5 + $0xa0] sm:$0xff]
    %v83 = vld [vmem:[#allocation5 + $0xa8] sm:$0xff]
    %v84 = vld [vmem:[#allocation5 + $0xb0] sm:$0xff]
    %v85 = vld [vmem:[#allocation5 + $0xb8] sm:$0xff]
    %v86 = vld [vmem:[#allocation5 + $0xc0] sm:$0xff]
    %v87 = vld [vmem:[#allocation5 + $0xc8] sm:$0xff]
    %v88 = vld [vmem:[#allocation5 + $0xd0] sm:$0xff]
    %v89 = vld [vmem:[#allocation5 + $0xd8] sm:$0xff]
    %v90 = vld [vmem:[#allocation5 + $0xe0] sm:$0xff]
    %v91 = vld [vmem:[#allocation5 + $0xe8] sm:$0xff]
    %v92 = vld [vmem:[#allocation5 + $0xf0] sm:$0xff]
    %v93 = vld [vmem:[#allocation5 + $0xf8] sm:$0xff]
    %v94 = vld [vmem:[%s2] sm:$0x1]
    %v96 = vlaneseq
    %v97 = vshrl.u32 %v96, 7
    %v98 = vsub.s32 0, %v97
    %v99 = vrot.slane %v94, %v98
    %101 = vmatprep.subr.mxu0 0.0
    %102 = vmatpush1.msra.mxu0 %v62
    %103 = vmatprep.subr.mxu0 0.0
    %104 = vmatpush1.msra.mxu0 %v63
    %105 = vmatprep.subr.mxu0 0.0
    %106 = vmatpush1.msra.mxu0 %v64
    %107 = vmatprep.subr.mxu0 0.0
    %108 = vmatpush1.msra.mxu0 %v65
    %109 = vmatprep.subr.mxu0 0.0
    %110 = vmatpush1.msra.mxu0 %v66
    %111 = vmatprep.subr.mxu0 0.0
    %112 = vmatpush1.msra.mxu0 %v67
    %113 = vmatprep.subr.mxu0 0.0
    %114 = vmatpush1.msra.mxu0 %v68
    %115 = vmatprep.subr.mxu0 0.0
    %116 = vmatpush1.msra.mxu0 %v69
    %117 = vmatprep.subr.mxu0 0.0
    %118 = vmatpush1.msra.mxu0 %v70
    %119 = vmatprep.subr.mxu0 0.0
    %120 = vmatpush1.msra.mxu0 %v71
    %121 = vmatprep.subr.mxu0 0.0
    %122 = vmatpush1.msra.mxu0 %v72
    %123 = vmatprep.subr.mxu0 0.0
    %124 = vmatpush1.msra.mxu0 %v73
    %125 = vmatprep.subr.mxu0 0.0
    %126 = vmatpush1.msra.mxu0 %v74
    %127 = vmatprep.subr.mxu0 0.0
    %128 = vmatpush1.msra.mxu0 %v75
    %129 = vmatprep.subr.mxu0 0.0
    %130 = vmatpush1.msra.mxu0 %v76
    %131 = vmatprep.subr.mxu0 0.0
    %132 = vmatpush1.msra.mxu0 %v77
    %133 = vmatprep.subr.mxu0 0.0
    %134 = vmatpush1.msra.mxu0 %v78
    %135 = vmatprep.subr.mxu0 0.0
    %136 = vmatpush1.msra.mxu0 %v79
    %137 = vmatprep.subr.mxu0 0.0
    %138 = vmatpush1.msra.mxu0 %v80
    %139 = vmatprep.subr.mxu0 0.0
    %140 = vmatpush1.msra.mxu0 %v81
    %141 = vmatprep.subr.mxu0 0.0
    %142 = vmatpush1.msra.mxu0 %v82
    %143 = vmatprep.subr.mxu0 0.0
    %144 = vmatpush1.msra.mxu0 %v83
    %145 = vmatprep.subr.mxu0 0.0
    %146 = vmatpush1.msra.mxu0 %v84
    %147 = vmatprep.subr.mxu0 0.0
    %148 = vmatpush1.msra.mxu0 %v85
    %149 = vmatprep.subr.mxu0 0.0
    %150 = vmatpush1.msra.mxu0 %v86
    %151 = vmatprep.subr.mxu0 0.0
    %152 = vmatpush1.msra.mxu0 %v87
    %153 = vmatprep.subr.mxu0 0.0
    %154 = vmatpush1.msra.mxu0 %v88
    %155 = vmatprep.subr.mxu0 0.0
    %156 = vmatpush1.msra.mxu0 %v89
    %157 = vmatprep.subr.mxu0 0.0
    %158 = vmatpush1.msra.mxu0 %v90
    %159 = vmatprep.subr.mxu0 0.0
    %160 = vmatpush1.msra.mxu0 %v91
    %161 = vmatprep.subr.mxu0 0.0
    %162 = vmatpush1.msra.mxu0 %v92
    %163 = vmatprep.subr.mxu0 0.0
    %164 = vmatpush1.msra.mxu0 %v93
    %165 = vmatprep.mubr.f32.mxu0 %v61
    %166 = vmatmul.mubr.f32.gmra.mrb[0].mxu0 %v60
    %v167 = vpop.f32.mrb[0].mxu0
    %v168 = vadd.f32 %v99, %v167
    %v169 = vpop.f32.mrb[0].mxu0
    %170 = vdwg.mxu0
    %v171 = vmax.f32 %v168, 0.0
    %v172 = vld [vmem:[#allocation7] sm:$0xff]
    %v173 = vld [vmem:[#allocation7 + $0x8] sm:$0xff]
    %v174 = vld [vmem:[#allocation7 + $0x10] sm:$0xff]
    %v175 = vld [vmem:[#allocation7 + $0x18] sm:$0xff]
    %v176 = vld [vmem:[#allocation7 + $0x20] sm:$0xff]
    %v177 = vld [vmem:[#allocation7 + $0x28] sm:$0xff]
    %v178 = vld [vmem:[#allocation7 + $0x30] sm:$0xff]
    %v179 = vld [vmem:[#allocation7 + $0x38] sm:$0xff]
    %v180 = vld [vmem:[#allocation7 + $0x40] sm:$0xff]
    %v181 = vld [vmem:[#allocation7 + $0x48] sm:$0xff]
    %v182 = vld [vmem:[#allocation7 + $0x50] sm:$0xff]
    %v183 = vld [vmem:[#allocation7 + $0x58] sm:$0xff]
    %v184 = vld [vmem:[#allocation7 + $0x60] sm:$0xff]
    %v185 = vld [vmem:[#allocation7 + $0x68] sm:$0xff]
    %v186 = vld [vmem:[#allocation7 + $0x70] sm:$0xff]
    %v187 = vld [vmem:[#allocation7 + $0x78] sm:$0xff]
    %v188 = vld [vmem:[%s4] sm:$0x1]
    %v190 = vlaneseq
    %v191 = vshrl.u32 %v190, 7
    %v192 = vsub.s32 0, %v191
    %v193 = vrot.slane %v188, %v192
    %195 = vmatprep.subr.mxu0 0.0
    %196 = vmatpush1.msra.mxu0 %v172
    %197 = vmatprep.subr.mxu0 0.0
    %198 = vmatpush1.msra.mxu0 %v173
    %199 = vmatprep.subr.mxu0 0.0
    %200 = vmatpush1.msra.mxu0 %v174
    %201 = vmatprep.subr.mxu0 0.0
    %202 = vmatpush1.msra.mxu0 %v175
    %203 = vmatprep.subr.mxu0 0.0
    %204 = vmatpush1.msra.mxu0 %v176
    %205 = vmatprep.subr.mxu0 0.0
    %206 = vmatpush1.msra.mxu0 %v177
    %207 = vmatprep.subr.mxu0 0.0
    %208 = vmatpush1.msra.mxu0 %v178
    %209 = vmatprep.subr.mxu0 0.0
    %210 = vmatpush1.msra.mxu0 %v179
    %211 = vmatprep.subr.mxu0 0.0
    %212 = vmatpush1.msra.mxu0 %v180
    %213 = vmatprep.subr.mxu0 0.0
    %214 = vmatpush1.msra.mxu0 %v181
    %215 = vmatprep.subr.mxu0 0.0
    %216 = vmatpush1.msra.mxu0 %v182
    %217 = vmatprep.subr.mxu0 0.0
    %218 = vmatpush1.msra.mxu0 %v183
    %219 = vmatprep.subr.mxu0 0.0
    %220 = vmatpush1.msra.mxu0 %v184
    %221 = vmatprep.subr.mxu0 0.0
    %222 = vmatpush1.msra.mxu0 %v185
    %223 = vmatprep.subr.mxu0 0.0
    %224 = vmatpush1.msra.mxu0 %v186
    %225 = vmatprep.subr.mxu0 0.0
    %226 = vmatpush1.msra.mxu0 %v187
    %227 = vmatprep.subr.mxu0 0.0
    %228 = vmatpush1.msra.mxu0 0.0
    %229 = vmatprep.subr.mxu0 0.0
    %230 = vmatpush1.msra.mxu0 0.0
    %231 = vmatprep.subr.mxu0 0.0
    %232 = vmatpush1.msra.mxu0 0.0
    %233 = vmatprep.subr.mxu0 0.0
    %234 = vmatpush1.msra.mxu0 0.0
    %235 = vmatprep.subr.mxu0 0.0
    %236 = vmatpush1.msra.mxu0 0.0
    %237 = vmatprep.subr.mxu0 0.0
    %238 = vmatpush1.msra.mxu0 0.0
    %239 = vmatprep.subr.mxu0 0.0
    %240 = vmatpush1.msra.mxu0 0.0
    %241 = vmatprep.subr.mxu0 0.0
    %242 = vmatpush1.msra.mxu0 0.0
    %243 = vmatprep.subr.mxu0 0.0
    %244 = vmatpush1.msra.mxu0 0.0
    %245 = vmatprep.subr.mxu0 0.0
    %246 = vmatpush1.msra.mxu0 0.0
    %247 = vmatprep.subr.mxu0 0.0
    %248 = vmatpush1.msra.mxu0 0.0
    %249 = vmatprep.subr.mxu0 0.0
    %250 = vmatpush1.msra.mxu0 0.0
    %251 = vmatprep.subr.mxu0 0.0
    %252 = vmatpush1.msra.mxu0 0.0
    %253 = vmatprep.subr.mxu0 0.0
    %254 = vmatpush1.msra.mxu0 0.0
    %255 = vmatprep.subr.mxu0 0.0
    %256 = vmatpush1.msra.mxu0 0.0
    %257 = vmatprep.subr.mxu0 0.0
    %258 = vmatpush1.msra.mxu0 0.0
    %259 = vmatprep.mubr.f32.mxu0 0.0
    %260 = vmatmul.mubr.f32.gmra.mrb[0].mxu0 %v171
    %v261 = vpop.f32.mrb[0].mxu0
    %v262 = vadd.f32 %v193, %v261
    %v263 = vpop.f32.mrb[0].mxu0
    %264 = vdwg.mxu0
    %v265 = vmax.f32 %v262, 0.0
    %266 = vst [vmem:[#allocation8] sm:$0xff] %v265
    // Predicated region
    $region34: #{tpu_custom_call.1} parent=1 // pred_check
      _
    $region35: #{tpu_custom_call.1} parent=1 // pred_check_branch
      %268 = sbr.rel (0) target = $region37
    $region36: #{tpu_custom_call.1} parent=1 // pred_region
      %s270 = ssub.s32 128, 128
      %271 = vsyncadd [#allocation4], %s270
      %s273 = sshll.u32 [#allocation8], 4
      %s274 = int_to_ptr.vmem [resolvable:$true] %s273
      %276 = dma.vmem_to_hbm [thread:$0]  %s274, 128, %s5, [#allocation4]
    $region37: #{tpu_custom_call.1} parent=1 // pred_fallthru
      _
    // Predicated region
    $region38: #{tpu_custom_call.1} parent=1 // pred_check
      _
    $region39: #{tpu_custom_call.1} parent=1 // pred_check_branch
      %278 = sbr.rel (0) target = $region41
    $region40: #{tpu_custom_call.1} parent=1 // pred_region
      %279 = dma.done [#allocation4], 128
    $region41: #{tpu_custom_call.1} parent=1 // pred_fallthru
      _
    %280 = vsyncpa [#allocation3], 1
    %281 = vsyncpa [#allocation6], 1
    %282 = vsyncpa [#allocation4], 1

</llo_original>
